<compile_context>
chip_gen: v7x
topology: tpu7x:2x2x1
jax: 0.10.0
libtpu: 0.0.40
codegen_flags: <defaults>
</compile_context>

<pallas_src>
import math
import jax
import jax.numpy as jnp
from jax.experimental import pallas as pl
from jax.experimental.pallas import tpu as pltpu


def _round_up(x: int, m: int) -> int:
    return (x + m - 1) // m * m


def ffn_kernel(x_ref, w1_ref, b1_ref, w2_ref, b2_ref, o_ref, acc_ref):
    # x_ref:  (tm, d_model_p)         w1_ref: (d_model_p, tkf)  b1_ref: (1, tkf)
    # w2_ref: (tkf, d_model_p)        b2_ref: (1, d_model_p)
    # o_ref:  (tm, d_model_p)         acc_ref: (tm, d_model_p) f32 scratch
    k = pl.program_id(1)

    @pl.when(k == 0)
    def _init():
        acc_ref[...] = jnp.zeros_like(acc_ref)

    # First GEMM slice: (tm, d_model) @ (d_model, tkf) -> f32, bias before ReLU.
    h = jnp.dot(x_ref[...], w1_ref[...], preferred_element_type=jnp.float32)
    h = jnp.maximum(h + b1_ref[...], 0.0)
    # TODO(synk): dropout is identity in eval mode; training-mode dropout would
    # use pltpu.prng_seed / pltpu.prng_random_bits to build a keep mask here.

    # Second GEMM slice accumulates into the f32 scratch.
    acc_ref[...] += jnp.dot(h.astype(w2_ref.dtype), w2_ref[...],
                            preferred_element_type=jnp.float32)

    @pl.when(k == pl.num_programs(1) - 1)
    def _finalize():
        o_ref[...] = (acc_ref[...] + b2_ref[...]).astype(o_ref.dtype)


def feed_forward_block(x, w1, b1, w2, b2, *, tm=256, tkf=512,
                       compute_dtype=None,
                       vmem_limit_bytes=48 * 1024 * 1024):
    """x: (batch, seq, d_model); w1: (d_model, d_ff); w2: (d_ff, d_model)."""
    B, S, d_model = x.shape
    d_ff = w1.shape[1]
    assert w1.shape == (d_model, d_ff)
    assert w2.shape == (d_ff, d_model)
    assert tm % 8 == 0

    out_dtype = x.dtype
    if compute_dtype is None:
        compute_dtype = x.dtype

    M = B * S
    # Lane-dense padding: d_model/d_ff to multiples of 128, M to a tm multiple.
    d_model_p = _round_up(d_model, 128)
    tkf = max(128, _round_up(min(tkf, _round_up(d_ff, 128)), 128))
    d_ff_p = _round_up(d_ff, tkf)
    Mp = _round_up(M, tm)

    x2d = x.reshape(M, d_model).astype(compute_dtype)
    x2d = jnp.pad(x2d, ((0, Mp - M), (0, d_model_p - d_model)))
    w1p = jnp.pad(w1.astype(compute_dtype),
                  ((0, d_model_p - d_model), (0, d_ff_p - d_ff)))
    b1p = jnp.pad(b1.astype(compute_dtype), (0, d_ff_p - d_ff)).reshape(1, d_ff_p)
    w2p = jnp.pad(w2.astype(compute_dtype),
                  ((0, d_ff_p - d_ff), (0, d_model_p - d_model)))
    b2p = jnp.pad(b2.astype(compute_dtype),
                  (0, d_model_p - d_model)).reshape(1, d_model_p)

    grid = (Mp // tm, d_ff_p // tkf)

    # Advisory cost estimate so XLA schedules surrounding ops sensibly.
    itemsize = jnp.dtype(compute_dtype).itemsize
    flops = 4 * Mp * d_model_p * d_ff_p  # two GEMMs, 2 flops per MAC
    bytes_accessed = itemsize * (
        x2d.size + Mp * d_model_p + grid[0] * (w1p.size + w2p.size)
        + b1p.size + b2p.size)

    out2d = pl.pallas_call(
        ffn_kernel,
        out_shape=jax.ShapeDtypeStruct((Mp, d_model_p), out_dtype),
        grid_spec=pltpu.PrefetchScalarGridSpec(
            num_scalar_prefetch=0,
            grid=grid,
            in_specs=[
                pl.BlockSpec((tm, d_model_p), lambda i, k: (i, 0)),   # x rows
                pl.BlockSpec((d_model_p, tkf), lambda i, k: (0, k)),  # W1 slice
                pl.BlockSpec((1, tkf), lambda i, k: (0, k)),          # b1 slice
                pl.BlockSpec((tkf, d_model_p), lambda i, k: (k, 0)),  # W2 slice
                pl.BlockSpec((1, d_model_p), lambda i, k: (0, 0)),    # b2
            ],
            out_specs=pl.BlockSpec((tm, d_model_p), lambda i, k: (i, 0)),
            scratch_shapes=[pltpu.VMEM((tm, d_model_p), jnp.float32)],
        ),
        compiler_params=pltpu.CompilerParams(
            dimension_semantics=("parallel", "arbitrary"),
            vmem_limit_bytes=vmem_limit_bytes),
        cost_estimate=pl.CostEstimate(flops=flops, transcendentals=0,
                                      bytes_accessed=bytes_accessed),
    )(x2d, w1p, b1p, w2p, b2p)

    return out2d[:M, :d_model].reshape(B, S, d_model)


def init_linear_params(key, in_features, out_features, dtype=jnp.float32):
    """Deterministic nn.Linear-style init: U(-1/sqrt(in), 1/sqrt(in))."""
    kw, kb = jax.random.split(key)
    bound = 1.0 / math.sqrt(in_features)
    # Stored pre-transposed as (in, out) so the kernel computes x @ W + b.
    w = jax.random.uniform(kw, (in_features, out_features), dtype,
                           minval=-bound, maxval=bound)
    b = jax.random.uniform(kb, (out_features,), dtype,
                           minval=-bound, maxval=bound)
    return w, b


if __name__ == "__main__":
    # Small shapes implied by the module: (batch, seq, d_model)
    batch, seq, d_model, d_ff = 2, 8, 32, 64

    key = jax.random.PRNGKey(0)
    kx, k1, k2 = jax.random.split(key, 3)

    x = jax.random.normal(kx, (batch, seq, d_model), jnp.float32)
    w1, b1 = init_linear_params(k1, d_model, d_ff)
    w2, b2 = init_linear_params(k2, d_ff, d_model)

    # Pure-JAX reference (same math, eval-mode dropout == identity).
    ref = (jnp.maximum(x.reshape(-1, d_model) @ w1 + b1, 0.0) @ w2 + b2
           ).reshape(batch, seq, d_model)

    # f32 path: strict numerical check.
    out = feed_forward_block(x, w1, b1, w2, b2)
    out = jax.block_until_ready(out)
    assert out.shape == (batch, seq, d_model)
    assert jnp.allclose(out, ref, atol=1e-5, rtol=1e-5)

    # bf16 operand path (production MXU dtype, f32 accumulation): loose check.
    out_bf16 = feed_forward_block(
        x.astype(jnp.bfloat16),
        w1.astype(jnp.bfloat16), b1.astype(jnp.bfloat16),
        w2.astype(jnp.bfloat16), b2.astype(jnp.bfloat16))
    out_bf16 = jax.block_until_ready(out_bf16)
    assert jnp.allclose(out_bf16.astype(jnp.float32), ref, atol=1e-1, rtol=1e-1)

    print("KERNEL_OK")
</pallas_src>

<mosaic_0001>
module attributes {stable_mosaic.version = 11 : i64} {
  func.func @ffn_kernel(%arg0: i32, %arg1: i32, %arg2: memref<256x128xf32, #tpu.memory_space<vmem>>, %arg3: memref<128x128xf32, #tpu.memory_space<vmem>>, %arg4: memref<1x128xf32, #tpu.memory_space<vmem>>, %arg5: memref<128x128xf32, #tpu.memory_space<vmem>>, %arg6: memref<1x128xf32, #tpu.memory_space<vmem>>, %arg7: memref<256x128xf32, #tpu.memory_space<vmem>>, %arg8: memref<256x128xf32, #tpu.memory_space<vmem>>) attributes {dimension_semantics = [#tpu.dimension_semantics<parallel>, #tpu.dimension_semantics<arbitrary>], iteration_bounds = array<i64: 1, 1>, scalar_prefetch = 0 : i64, scratch_operands = 1 : i64, tpu.core_type = #tpu.core_type<tc>, window_params = [{transform_indices = @transform_0, window_bounds = array<i64: 256, 128>}, {transform_indices = @transform_1, window_bounds = array<i64: 128, 128>}, {transform_indices = @transform_2, window_bounds = array<i64: 1, 128>}, {transform_indices = @transform_3, window_bounds = array<i64: 128, 128>}, {pipeline_mode = #tpu.pipeline_mode<synchronous>, transform_indices = @transform_4, window_bounds = array<i64: 1, 128>}, {transform_indices = @transform_5, window_bounds = array<i64: 256, 128>}]} {
    %c0_i32 = arith.constant 0 : i32
    %0 = arith.cmpi eq, %arg1, %c0_i32 : i32
    %1 = arith.extui %0 : i1 to i32
    %c0_i32_0 = arith.constant 0 : i32
    %2 = arith.cmpi ne, %1, %c0_i32_0 : i32
    scf.if %2 {
      %cst_16 = arith.constant 0.000000e+00 : f32
      %19 = vector.broadcast %cst_16 : f32 to vector<256x128xf32>
      %c0_17 = arith.constant 0 : index
      %c0_18 = arith.constant 0 : index
      %20 = vector.load %arg8[%c0_17, %c0_18] : memref<256x128xf32, #tpu.memory_space<vmem>>, vector<256x128xf32>
      tpu.vector_store %arg8[%c0_17, %c0_18], %19 {strides = array<i32>} : memref<256x128xf32, #tpu.memory_space<vmem>>, vector<256x128xf32>,
    } else {
    }
    %c0 = arith.constant 0 : index
    %c0_1 = arith.constant 0 : index
    %3 = vector.load %arg2[%c0, %c0_1] : memref<256x128xf32, #tpu.memory_space<vmem>>, vector<256x128xf32>
    %c0_2 = arith.constant 0 : index
    %c0_3 = arith.constant 0 : index
    %4 = vector.load %arg3[%c0_2, %c0_3] : memref<128x128xf32, #tpu.memory_space<vmem>>, vector<128x128xf32>
    %cst = arith.constant dense<0.000000e+00> : vector<256x128xf32>
    %5 = tpu.matmul %3, %4, %cst {dimension_numbers = #tpu.dot_dimension_numbers<[1], [0], [0], [1], [0, 0, 1, 1], [], []>} : vector<256x128xf32>, vector<128x128xf32>, vector<256x128xf32> -> vector<256x128xf32>
    %c0_4 = arith.constant 0 : index
    %c0_5 = arith.constant 0 : index
    %6 = vector.load %arg4[%c0_4, %c0_5] : memref<1x128xf32, #tpu.memory_space<vmem>>, vector<1x128xf32>
    %7 = vector.broadcast %6 : vector<1x128xf32> to vector<256x128xf32>
    %8 = arith.addf %5, %7 : vector<256x128xf32>
    %cst_6 = arith.constant 0.000000e+00 : f32
    %9 = vector.broadcast %cst_6 : f32 to vector<256x128xf32>
    %10 = arith.maximumf %8, %9 : vector<256x128xf32>
    %c0_7 = arith.constant 0 : index
    %c0_8 = arith.constant 0 : index
    %11 = vector.load %arg8[%c0_7, %c0_8] : memref<256x128xf32, #tpu.memory_space<vmem>>, vector<256x128xf32>
    %c0_9 = arith.constant 0 : index
    %c0_10 = arith.constant 0 : index
    %12 = vector.load %arg5[%c0_9, %c0_10] : memref<128x128xf32, #tpu.memory_space<vmem>>, vector<128x128xf32>
    %cst_11 = arith.constant dense<0.000000e+00> : vector<256x128xf32>
    %13 = tpu.matmul %10, %12, %cst_11 {dimension_numbers = #tpu.dot_dimension_numbers<[1], [0], [0], [1], [0, 0, 1, 1], [], []>} : vector<256x128xf32>, vector<128x128xf32>, vector<256x128xf32> -> vector<256x128xf32>
    %14 = arith.addf %11, %13 : vector<256x128xf32>
    %c0_12 = arith.constant 0 : index
    %c0_13 = arith.constant 0 : index
    %15 = vector.load %arg8[%c0_12, %c0_13] : memref<256x128xf32, #tpu.memory_space<vmem>>, vector<256x128xf32>
    tpu.vector_store %arg8[%c0_12, %c0_13], %14 {strides = array<i32>} : memref<256x128xf32, #tpu.memory_space<vmem>>, vector<256x128xf32>,
    %c0_i32_14 = arith.constant 0 : i32
    %16 = arith.cmpi eq, %arg1, %c0_i32_14 : i32
    %17 = arith.extui %16 : i1 to i32
    %c0_i32_15 = arith.constant 0 : i32
    %18 = arith.cmpi ne, %17, %c0_i32_15 : i32
    scf.if %18 {
      %c0_16 = arith.constant 0 : index
      %c0_17 = arith.constant 0 : index
      %19 = vector.load %arg8[%c0_16, %c0_17] : memref<256x128xf32, #tpu.memory_space<vmem>>, vector<256x128xf32>
      %c0_18 = arith.constant 0 : index
      %c0_19 = arith.constant 0 : index
      %20 = vector.load %arg6[%c0_18, %c0_19] : memref<1x128xf32, #tpu.memory_space<vmem>>, vector<1x128xf32>
      %21 = vector.broadcast %20 : vector<1x128xf32> to vector<256x128xf32>
      %22 = arith.addf %19, %21 : vector<256x128xf32>
      %c0_20 = arith.constant 0 : index
      %c0_21 = arith.constant 0 : index
      %23 = vector.load %arg7[%c0_20, %c0_21] : memref<256x128xf32, #tpu.memory_space<vmem>>, vector<256x128xf32>
      tpu.vector_store %arg7[%c0_20, %c0_21], %22 {strides = array<i32>} : memref<256x128xf32, #tpu.memory_space<vmem>>, vector<256x128xf32>,
    } else {
    }
    return
  }
  func.func @transform_0(%arg0: i32, %arg1: i32) -> (i32, i32) {
    %c0_i32 = arith.constant 0 : i32
    %c0_i32_0 = arith.constant 0 : i32
    return %arg0, %c0_i32 : i32, i32
  }
  func.func @transform_1(%arg0: i32, %arg1: i32) -> (i32, i32) {
    %c0_i32 = arith.constant 0 : i32
    %c0_i32_0 = arith.constant 0 : i32
    return %c0_i32, %arg1 : i32, i32
  }
  func.func @transform_2(%arg0: i32, %arg1: i32) -> (i32, i32) {
    %c0_i32 = arith.constant 0 : i32
    %c0_i32_0 = arith.constant 0 : i32
    return %c0_i32, %arg1 : i32, i32
  }
  func.func @transform_3(%arg0: i32, %arg1: i32) -> (i32, i32) {
    %c0_i32 = arith.constant 0 : i32
    %c0_i32_0 = arith.constant 0 : i32
    return %arg1, %c0_i32 : i32, i32
  }
  func.func @transform_4(%arg0: i32, %arg1: i32) -> (i32, i32) {
    %c0_i32 = arith.constant 0 : i32
    %c0_i32_0 = arith.constant 0 : i32
    %c0_i32_1 = arith.constant 0 : i32
    return %c0_i32, %c0_i32_0 : i32, i32
  }
  func.func @transform_5(%arg0: i32, %arg1: i32) -> (i32, i32) {
    %c0_i32 = arith.constant 0 : i32
    %c0_i32_0 = arith.constant 0 : i32
    return %arg0, %c0_i32 : i32, i32
  }
}

</mosaic_0001>

<llo_original>
// kernel: tpu_custom_call.1
$region0: #{tpu_custom_call.1}
  #allocation0 [shape = 'u32[]', space=smem, size = 0x4, offset = 0x4, fixed_abs, tag = 'smem constant byte address 0x4 - core index']
  #allocation1 [shape = 'u32[144,128]{1,0:T(1,128)}', space=vmem, size = 0x12000, scoped, tag = 'internal scratch']
  #allocation2 [shape = 'f32[256,128]{1,0:T(8,128)}', space=vmem, size = 0x20000, scoped, tag = 'scratch operand']
  %s0 = inlined_call_operand.hbm [shape: f32[256,128], index: 0, kind: input, shape index: {}]
  %s1 = inlined_call_operand.hbm [shape: f32[128,128], index: 1, kind: input, shape index: {}]
  %s2 = inlined_call_operand.vmem [shape: f32[1,128], index: 2, kind: input, shape index: {}]
  %s3 = inlined_call_operand.hbm [shape: f32[128,128], index: 3, kind: input, shape index: {}]
  %s4 = inlined_call_operand.vmem [shape: f32[1,128], index: 4, kind: input, shape index: {}]
  %s5 = inlined_call_operand.hbm [shape: f32[256,128], index: 5, kind: output, shape index: {}]
  %s6 = sld [smem:[#allocation0]]
  $region50: #{tpu_custom_call.1} parent=0
    _
  %s8 = ssub.s32 1, %s6
  %s9 = scalar_select 0, %s8, %s6
  $region1: #{tpu_custom_call.1} parent=0
    #allocation3 [shape = 'u8[131072]{0}', space=vmem, size = 0x20000, scoped, tag = 'input window, operand 0, single buffered']
    #allocation4 [shape = 's32[1]{0}', space=sflag, size = 0x4, scoped, tag = 'scoped memory for tpu_custom_call.1']
    #allocation5 [shape = 's32[1]{0}', space=sflag, size = 0x4, scoped, tag = 'scoped memory for tpu_custom_call.1']
    #allocation6 [shape = 'u8[65536]{0}', space=vmem, size = 0x10000, scoped, tag = 'input window, operand 1, single buffered']
    #allocation7 [shape = 's32[1]{0}', space=sflag, size = 0x4, scoped, tag = 'scoped memory for tpu_custom_call.1']
    #allocation8 [shape = 'u8[65536]{0}', space=vmem, size = 0x10000, scoped, tag = 'input window, operand 3, single buffered']
    #allocation9 [shape = 'u8[131072]{0}', space=vmem, size = 0x20000, scoped, tag = 'output window, operand 0, single buffered']
    %10 = vsyncpa [#allocation4], 0
    %11 = vsyncpa [#allocation7], 0
    %12 = vsyncpa [#allocation5], 0
    // Predicated region
    $region2: #{tpu_custom_call.1} parent=1 // pred_check
      _
    $region3: #{tpu_custom_call.1} parent=1 // pred_check_branch
      %14 = sbr.rel (0) target = $region5
    $region4: #{tpu_custom_call.1} parent=1 // pred_region
      %s16 = ssub.s32 4096, 4096
      %17 = vsyncadd [#allocation4], %s16
      %s18 = sshll.u32 [#allocation3], 4
      %s19 = int_to_ptr.vmem [resolvable:$true] %s18
      %24 = dma.hbm_to_vmem [thread:$0]  %s0, 4096, %s19, [#allocation4], 128, 128, 8
    $region5: #{tpu_custom_call.1} parent=1 // pred_fallthru
      _
    // Predicated region
    $region6: #{tpu_custom_call.1} parent=1 // pred_check
      _
    $region7: #{tpu_custom_call.1} parent=1 // pred_check_branch
      %26 = sbr.rel (0) target = $region9
    $region8: #{tpu_custom_call.1} parent=1 // pred_region
      %s28 = ssub.s32 2048, 2048
      %29 = vsyncadd [#allocation7], %s28
      %s30 = sshll.u32 [#allocation6], 4
      %s31 = int_to_ptr.vmem [resolvable:$true] %s30
      %36 = dma.hbm_to_vmem [thread:$0]  %s1, 2048, %s31, [#allocation7], 128, 128, 8
    $region9: #{tpu_custom_call.1} parent=1 // pred_fallthru
      _
    // Predicated region
    $region10: #{tpu_custom_call.1} parent=1 // pred_check
      _
    $region11: #{tpu_custom_call.1} parent=1 // pred_check_branch
      %38 = sbr.rel (0) target = $region13
    $region12: #{tpu_custom_call.1} parent=1 // pred_region
      _
    $region13: #{tpu_custom_call.1} parent=1 // pred_fallthru
      _
    // Predicated region
    $region14: #{tpu_custom_call.1} parent=1 // pred_check
      _
    $region15: #{tpu_custom_call.1} parent=1 // pred_check_branch
      %40 = sbr.rel (0) target = $region17
    $region16: #{tpu_custom_call.1} parent=1 // pred_region
      %s42 = ssub.s32 2048, 2048
      %43 = vsyncadd [#allocation7], %s42
      %s44 = sshll.u32 [#allocation8], 4
      %s45 = int_to_ptr.vmem [resolvable:$true] %s44
      %50 = dma.hbm_to_vmem [thread:$0]  %s3, 2048, %s45, [#allocation7], 128, 128, 8
    $region17: #{tpu_custom_call.1} parent=1 // pred_fallthru
      _
    // Predicated region
    $region18: #{tpu_custom_call.1} parent=1 // pred_check
      _
    $region19: #{tpu_custom_call.1} parent=1 // pred_check_branch
      %52 = sbr.rel (0) target = $region21
    $region20: #{tpu_custom_call.1} parent=1 // pred_region
      _
    $region21: #{tpu_custom_call.1} parent=1 // pred_fallthru
      _
    // Predicated region
    $region22: #{tpu_custom_call.1} parent=1 // pred_check
      _
    $region23: #{tpu_custom_call.1} parent=1 // pred_check_branch
      %54 = sbr.rel (0) target = $region25
    $region24: #{tpu_custom_call.1} parent=1 // pred_region
      %55 = dma.done [#allocation4], 4096
    $region25: #{tpu_custom_call.1} parent=1 // pred_fallthru
      _
    // Predicated region
    $region26: #{tpu_custom_call.1} parent=1 // pred_check
      _
    $region27: #{tpu_custom_call.1} parent=1 // pred_check_branch
      %57 = sbr.rel (0) target = $region29
    $region28: #{tpu_custom_call.1} parent=1 // pred_region
      %58 = dma.done [#allocation7], 2048
    $region29: #{tpu_custom_call.1} parent=1 // pred_fallthru
      _
    // Predicated region
    $region30: #{tpu_custom_call.1} parent=1 // pred_check
      _
    $region31: #{tpu_custom_call.1} parent=1 // pred_check_branch
      %60 = sbr.rel (0) target = $region33
    $region32: #{tpu_custom_call.1} parent=1 // pred_region
      %61 = dma.done [#allocation7], 2048
    $region33: #{tpu_custom_call.1} parent=1 // pred_fallthru
      _
    %p62 = scmp.eq.s32.totalorder 0, 0
    // Predicated region
    $region34: #{tpu_custom_call.1} parent=1 // pred_check
      %p63 = pneg %p62
    $region35: #{tpu_custom_call.1} parent=1 // pred_check_branch
      %65 = sbr.rel (%p63) target = $region37
    $region36: #{tpu_custom_call.1} parent=1 // pred_region
      %66 = vst [vmem:[#allocation2] sm:$0xff] 0.0
      %67 = vst [vmem:[#allocation2 + $0x8] sm:$0xff] 0.0
      %68 = vst [vmem:[#allocation2 + $0x10] sm:$0xff] 0.0
      %69 = vst [vmem:[#allocation2 + $0x18] sm:$0xff] 0.0
      %70 = vst [vmem:[#allocation2 + $0x20] sm:$0xff] 0.0
      %71 = vst [vmem:[#allocation2 + $0x28] sm:$0xff] 0.0
      %72 = vst [vmem:[#allocation2 + $0x30] sm:$0xff] 0.0
      %73 = vst [vmem:[#allocation2 + $0x38] sm:$0xff] 0.0
      %74 = vst [vmem:[#allocation2 + $0x40] sm:$0xff] 0.0
      %75 = vst [vmem:[#allocation2 + $0x48] sm:$0xff] 0.0
      %76 = vst [vmem:[#allocation2 + $0x50] sm:$0xff] 0.0
      %77 = vst [vmem:[#allocation2 + $0x58] sm:$0xff] 0.0
      %78 = vst [vmem:[#allocation2 + $0x60] sm:$0xff] 0.0
      %79 = vst [vmem:[#allocation2 + $0x68] sm:$0xff] 0.0
      %80 = vst [vmem:[#allocation2 + $0x70] sm:$0xff] 0.0
      %81 = vst [vmem:[#allocation2 + $0x78] sm:$0xff] 0.0
      %82 = vst [vmem:[#allocation2 + $0x80] sm:$0xff] 0.0
      %83 = vst [vmem:[#allocation2 + $0x88] sm:$0xff] 0.0
      %84 = vst [vmem:[#allocation2 + $0x90] sm:$0xff] 0.0
      %85 = vst [vmem:[#allocation2 + $0x98] sm:$0xff] 0.0
      %86 = vst [vmem:[#allocation2 + $0xa0] sm:$0xff] 0.0
      %87 = vst [vmem:[#allocation2 + $0xa8] sm:$0xff] 0.0
      %88 = vst [vmem:[#allocation2 + $0xb0] sm:$0xff] 0.0
      %89 = vst [vmem:[#allocation2 + $0xb8] sm:$0xff] 0.0
      %90 = vst [vmem:[#allocation2 + $0xc0] sm:$0xff] 0.0
      %91 = vst [vmem:[#allocation2 + $0xc8] sm:$0xff] 0.0
      %92 = vst [vmem:[#allocation2 + $0xd0] sm:$0xff] 0.0
      %93 = vst [vmem:[#allocation2 + $0xd8] sm:$0xff] 0.0
      %94 = vst [vmem:[#allocation2 + $0xe0] sm:$0xff] 0.0
      %95 = vst [vmem:[#allocation2 + $0xe8] sm:$0xff] 0.0
      %96 = vst [vmem:[#allocation2 + $0xf0] sm:$0xff] 0.0
      %97 = vst [vmem:[#allocation2 + $0xf8] sm:$0xff] 0.0
    $region37: #{tpu_custom_call.1} parent=1 // pred_fallthru
      _
    %v98 = vld [vmem:[#allocation3] sm:$0xff]
    %v99 = vld [vmem:[#allocation3 + $0x8] sm:$0xff]
    %v100 = vld [vmem:[#allocation3 + $0x10] sm:$0xff]
    %v101 = vld [vmem:[#allocation3 + $0x18] sm:$0xff]
    %v102 = vld [vmem:[#allocation3 + $0x20] sm:$0xff]
    %v103 = vld [vmem:[#allocation3 + $0x28] sm:$0xff]
    %v104 = vld [vmem:[#allocation3 + $0x30] sm:$0xff]
    %v105 = vld [vmem:[#allocation3 + $0x38] sm:$0xff]
    %v106 = vld [vmem:[#allocation3 + $0x40] sm:$0xff]
    %v107 = vld [vmem:[#allocation3 + $0x48] sm:$0xff]
    %v108 = vld [vmem:[#allocation3 + $0x50] sm:$0xff]
    %v109 = vld [vmem:[#allocation3 + $0x58] sm:$0xff]
    %v110 = vld [vmem:[#allocation3 + $0x60] sm:$0xff]
    %v111 = vld [vmem:[#allocation3 + $0x68] sm:$0xff]
    %v112 = vld [vmem:[#allocation3 + $0x70] sm:$0xff]
    %v113 = vld [vmem:[#allocation3 + $0x78] sm:$0xff]
    %v114 = vld [vmem:[#allocation3 + $0x80] sm:$0xff]
    %v115 = vld [vmem:[#allocation3 + $0x88] sm:$0xff]
    %v116 = vld [vmem:[#allocation3 + $0x90] sm:$0xff]
    %v117 = vld [vmem:[#allocation3 + $0x98] sm:$0xff]
    %v118 = vld [vmem:[#allocation3 + $0xa0] sm:$0xff]
    %v119 = vld [vmem:[#allocation3 + $0xa8] sm:$0xff]
    %v120 = vld [vmem:[#allocation3 + $0xb0] sm:$0xff]
    %v121 = vld [vmem:[#allocation3 + $0xb8] sm:$0xff]
    %v122 = vld [vmem:[#allocation3 + $0xc0] sm:$0xff]
    %v123 = vld [vmem:[#allocation3 + $0xc8] sm:$0xff]
    %v124 = vld [vmem:[#allocation3 + $0xd0] sm:$0xff]
    %v125 = vld [vmem:[#allocation3 + $0xd8] sm:$0xff]
    %v126 = vld [vmem:[#allocation3 + $0xe0] sm:$0xff]
    %v127 = vld [vmem:[#allocation3 + $0xe8] sm:$0xff]
    %v128 = vld [vmem:[#allocation3 + $0xf0] sm:$0xff]
    %v129 = vld [vmem:[#allocation3 + $0xf8] sm:$0xff]
    %v130 = vld [vmem:[#allocation6] sm:$0xff]
    %v131 = vld [vmem:[#allocation6 + $0x8] sm:$0xff]
    %v132 = vld [vmem:[#allocation6 + $0x10] sm:$0xff]
    %v133 = vld [vmem:[#allocation6 + $0x18] sm:$0xff]
    %v134 = vld [vmem:[#allocation6 + $0x20] sm:$0xff]
    %v135 = vld [vmem:[#allocation6 + $0x28] sm:$0xff]
    %v136 = vld [vmem:[#allocation6 + $0x30] sm:$0xff]
    %v137 = vld [vmem:[#allocation6 + $0x38] sm:$0xff]
    %v138 = vld [vmem:[#allocation6 + $0x40] sm:$0xff]
    %v139 = vld [vmem:[#allocation6 + $0x48] sm:$0xff]
    %v140 = vld [vmem:[#allocation6 + $0x50] sm:$0xff]
    %v141 = vld [vmem:[#allocation6 + $0x58] sm:$0xff]
    %v142 = vld [vmem:[#allocation6 + $0x60] sm:$0xff]
    %v143 = vld [vmem:[#allocation6 + $0x68] sm:$0xff]
    %v144 = vld [vmem:[#allocation6 + $0x70] sm:$0xff]
    %v145 = vld [vmem:[#allocation6 + $0x78] sm:$0xff]
    %v146 = vld [vmem:[%s2] sm:$0x1]
    %v148 = vlaneseq
    %v149 = vshrl.u32 %v148, 7
    %v150 = vsub.s32 0, %v149
    %v151 = vrot.slane %v146, %v150
    %153 = vmatprep.subr.mxu0 0.0
    %154 = vmatpush1.msra.mxu0 %v130
    %155 = vmatprep.subr.mxu0 0.0
    %156 = vmatpush1.msra.mxu0 %v131
    %157 = vmatprep.subr.mxu0 0.0
    %158 = vmatpush1.msra.mxu0 %v132
    %159 = vmatprep.subr.mxu0 0.0
    %160 = vmatpush1.msra.mxu0 %v133
    %161 = vmatprep.subr.mxu0 0.0
    %162 = vmatpush1.msra.mxu0 %v134
    %163 = vmatprep.subr.mxu0 0.0
    %164 = vmatpush1.msra.mxu0 %v135
    %165 = vmatprep.subr.mxu0 0.0
    %166 = vmatpush1.msra.mxu0 %v136
    %167 = vmatprep.subr.mxu0 0.0
    %168 = vmatpush1.msra.mxu0 %v137
    %169 = vmatprep.subr.mxu0 0.0
    %170 = vmatpush1.msra.mxu0 %v138
    %171 = vmatprep.subr.mxu0 0.0
    %172 = vmatpush1.msra.mxu0 %v139
    %173 = vmatprep.subr.mxu0 0.0
    %174 = vmatpush1.msra.mxu0 %v140
    %175 = vmatprep.subr.mxu0 0.0
    %176 = vmatpush1.msra.mxu0 %v141
    %177 = vmatprep.subr.mxu0 0.0
    %178 = vmatpush1.msra.mxu0 %v142
    %179 = vmatprep.subr.mxu0 0.0
    %180 = vmatpush1.msra.mxu0 %v143
    %181 = vmatprep.subr.mxu0 0.0
    %182 = vmatpush1.msra.mxu0 %v144
    %183 = vmatprep.subr.mxu0 0.0
    %184 = vmatpush1.msra.mxu0 %v145
    %185 = vmatprep.subr.mxu0 0.0
    %186 = vmatpush1.msra.mxu0 0.0
    %187 = vmatprep.subr.mxu0 0.0
    %188 = vmatpush1.msra.mxu0 0.0
    %189 = vmatprep.subr.mxu0 0.0
    %190 = vmatpush1.msra.mxu0 0.0
    %191 = vmatprep.subr.mxu0 0.0
    %192 = vmatpush1.msra.mxu0 0.0
    %193 = vmatprep.subr.mxu0 0.0
    %194 = vmatpush1.msra.mxu0 0.0
    %195 = vmatprep.subr.mxu0 0.0
    %196 = vmatpush1.msra.mxu0 0.0
    %197 = vmatprep.subr.mxu0 0.0
    %198 = vmatpush1.msra.mxu0 0.0
    %199 = vmatprep.subr.mxu0 0.0
    %200 = vmatpush1.msra.mxu0 0.0
    %201 = vmatprep.subr.mxu0 0.0
    %202 = vmatpush1.msra.mxu0 0.0
    %203 = vmatprep.subr.mxu0 0.0
    %204 = vmatpush1.msra.mxu0 0.0
    %205 = vmatprep.subr.mxu0 0.0
    %206 = vmatpush1.msra.mxu0 0.0
    %207 = vmatprep.subr.mxu0 0.0
    %208 = vmatpush1.msra.mxu0 0.0
    %209 = vmatprep.subr.mxu0 0.0
    %210 = vmatpush1.msra.mxu0 0.0
    %211 = vmatprep.subr.mxu0 0.0
    %212 = vmatpush1.msra.mxu0 0.0
    %213 = vmatprep.subr.mxu0 0.0
    %214 = vmatpush1.msra.mxu0 0.0
    %215 = vmatprep.subr.mxu0 0.0
    %216 = vmatpush1.msra.mxu0 0.0
    %217 = vmatprep.mubr.f32.mxu0 0.0
    %218 = vmatmul.mubr.f32.gmra.mrb[0].mxu0 %v98
    %v219 = vpop.f32.mrb[0].mxu0
    %v220 = vadd.f32 %v151, %v219
    %v221 = vpop.f32.mrb[0].mxu0
    %222 = vmatprep.mubr.f32.mxu0 0.0
    %223 = vmatmul.mubr.f32.gmra.mrb[0].mxu0 %v99
    %v224 = vpop.f32.mrb[0].mxu0
    %v225 = vadd.f32 %v151, %v224
    %v226 = vpop.f32.mrb[0].mxu0
    %227 = vmatprep.mubr.f32.mxu0 0.0
    %228 = vmatmul.mubr.f32.gmra.mrb[0].mxu0 %v100
    %v229 = vpop.f32.mrb[0].mxu0
    %v230 = vadd.f32 %v151, %v229
    %v231 = vpop.f32.mrb[0].mxu0
    %232 = vmatprep.mubr.f32.mxu0 0.0
    %233 = vmatmul.mubr.f32.gmra.mrb[0].mxu0 %v101
    %v234 = vpop.f32.mrb[0].mxu0
    %v235 = vadd.f32 %v151, %v234
    %v236 = vpop.f32.mrb[0].mxu0
    %237 = vmatprep.mubr.f32.mxu0 0.0
    %238 = vmatmul.mubr.f32.gmra.mrb[0].mxu0 %v102
    %v239 = vpop.f32.mrb[0].mxu0
    %v240 = vadd.f32 %v151, %v239
    %v241 = vpop.f32.mrb[0].mxu0
    %242 = vmatprep.mubr.f32.mxu0 0.0
    %243 = vmatmul.mubr.f32.gmra.mrb[0].mxu0 %v103
    %v244 = vpop.f32.mrb[0].mxu0
    %v245 = vadd.f32 %v151, %v244
    %v246 = vpop.f32.mrb[0].mxu0
    %247 = vmatprep.mubr.f32.mxu0 0.0
    %248 = vmatmul.mubr.f32.gmra.mrb[0].mxu0 %v104
    %v249 = vpop.f32.mrb[0].mxu0
    %v250 = vadd.f32 %v151, %v249
    %v251 = vpop.f32.mrb[0].mxu0
    %252 = vmatprep.mubr.f32.mxu0 0.0
    %253 = vmatmul.mubr.f32.gmra.mrb[0].mxu0 %v105
    %v254 = vpop.f32.mrb[0].mxu0
    %v255 = vadd.f32 %v151, %v254
    %v256 = vpop.f32.mrb[0].mxu0
    %257 = vmatprep.mubr.f32.mxu0 0.0
    %258 = vmatmul.mubr.f32.gmra.mrb[0].mxu0 %v106
    %v259 = vpop.f32.mrb[0].mxu0
    %v260 = vadd.f32 %v151, %v259
    %v261 = vpop.f32.mrb[0].mxu0
    %262 = vmatprep.mubr.f32.mxu0 0.0
    %263 = vmatmul.mubr.f32.gmra.mrb[0].mxu0 %v107
    %v264 = vpop.f32.mrb[0].mxu0
    %v265 = vadd.f32 %v151, %v264
    %v266 = vpop.f32.mrb[0].mxu0
    %267 = vmatprep.mubr.f32.mxu0 0.0
    %268 = vmatmul.mubr.f32.gmra.mrb[0].mxu0 %v108
    %v269 = vpop.f32.mrb[0].mxu0
    %v270 = vadd.f32 %v151, %v269
    %v271 = vpop.f32.mrb[0].mxu0
    %272 = vmatprep.mubr.f32.mxu0 0.0
    %273 = vmatmul.mubr.f32.gmra.mrb[0].mxu0 %v109
    %v274 = vpop.f32.mrb[0].mxu0
    %v275 = vadd.f32 %v151, %v274
    %v276 = vpop.f32.mrb[0].mxu0
    %277 = vmatprep.mubr.f32.mxu0 0.0
    %278 = vmatmul.mubr.f32.gmra.mrb[0].mxu0 %v110
    %v279 = vpop.f32.mrb[0].mxu0
    %v280 = vadd.f32 %v151, %v279
    %v281 = vpop.f32.mrb[0].mxu0
    %282 = vmatprep.mubr.f32.mxu0 0.0
    %283 = vmatmul.mubr.f32.gmra.mrb[0].mxu0 %v111
    %v284 = vpop.f32.mrb[0].mxu0
    %v285 = vadd.f32 %v151, %v284
    %v286 = vpop.f32.mrb[0].mxu0
    %287 = vmatprep.mubr.f32.mxu0 0.0
    %288 = vmatmul.mubr.f32.gmra.mrb[0].mxu0 %v112
    %v289 = vpop.f32.mrb[0].mxu0
    %v290 = vadd.f32 %v151, %v289
    %v291 = vpop.f32.mrb[0].mxu0
    %292 = vmatprep.mubr.f32.mxu0 0.0
    %293 = vmatmul.mubr.f32.gmra.mrb[0].mxu0 %v113
    %v294 = vpop.f32.mrb[0].mxu0
    %v295 = vadd.f32 %v151, %v294
    %v296 = vpop.f32.mrb[0].mxu0
    %297 = vmatprep.mubr.f32.mxu0 0.0
    %298 = vmatmul.mubr.f32.gmra.mrb[0].mxu0 %v114
    %v299 = vpop.f32.mrb[0].mxu0
    %v300 = vadd.f32 %v151, %v299
    %v301 = vpop.f32.mrb[0].mxu0
    %302 = vmatprep.mubr.f32.mxu0 0.0
    %303 = vmatmul.mubr.f32.gmra.mrb[0].mxu0 %v115
    %v304 = vpop.f32.mrb[0].mxu0
    %v305 = vadd.f32 %v151, %v304
    %v306 = vpop.f32.mrb[0].mxu0
    %307 = vmatprep.mubr.f32.mxu0 0.0
    %308 = vmatmul.mubr.f32.gmra.mrb[0].mxu0 %v116
    %v309 = vpop.f32.mrb[0].mxu0
    %v310 = vadd.f32 %v151, %v309
    %v311 = vpop.f32.mrb[0].mxu0
    %312 = vmatprep.mubr.f32.mxu0 0.0
    %313 = vmatmul.mubr.f32.gmra.mrb[0].mxu0 %v117
    %v314 = vpop.f32.mrb[0].mxu0
    %v315 = vadd.f32 %v151, %v314
    %v316 = vpop.f32.mrb[0].mxu0
    %317 = vmatprep.mubr.f32.mxu0 0.0
    %318 = vmatmul.mubr.f32.gmra.mrb[0].mxu0 %v118
    %v319 = vpop.f32.mrb[0].mxu0
    %v320 = vadd.f32 %v151, %v319
    %v321 = vpop.f32.mrb[0].mxu0
    %322 = vmatprep.mubr.f32.mxu0 0.0
    %323 = vmatmul.mubr.f32.gmra.mrb[0].mxu0 %v119
    %v324 = vpop.f32.mrb[0].mxu0
    %v325 = vadd.f32 %v151, %v324
    %v326 = vpop.f32.mrb[0].mxu0
    %327 = vmatprep.mubr.f32.mxu0 0.0
    %328 = vmatmul.mubr.f32.gmra.mrb[0].mxu0 %v120
    %v329 = vpop.f32.mrb[0].mxu0
    %v330 = vadd.f32 %v151, %v329
    %v331 = vpop.f32.mrb[0].mxu0
    %332 = vmatprep.mubr.f32.mxu0 0.0
    %333 = vmatmul.mubr.f32.gmra.mrb[0].mxu0 %v121
    %v334 = vpop.f32.mrb[0].mxu0
    %v335 = vadd.f32 %v151, %v334
    %v336 = vpop.f32.mrb[0].mxu0
    %337 = vmatprep.mubr.f32.mxu0 0.0
    %338 = vmatmul.mubr.f32.gmra.mrb[0].mxu0 %v122
    %v339 = vpop.f32.mrb[0].mxu0
    %v340 = vadd.f32 %v151, %v339
    %v341 = vpop.f32.mrb[0].mxu0
    %342 = vmatprep.mubr.f32.mxu0 0.0
    %343 = vmatmul.mubr.f32.gmra.mrb[0].mxu0 %v123
    %v344 = vpop.f32.mrb[0].mxu0
    %v345 = vadd.f32 %v151, %v344
    %v346 = vpop.f32.mrb[0].mxu0
    %347 = vmatprep.mubr.f32.mxu0 0.0
    %348 = vmatmul.mubr.f32.gmra.mrb[0].mxu0 %v124
    %v349 = vpop.f32.mrb[0].mxu0
    %v350 = vadd.f32 %v151, %v349
    %v351 = vpop.f32.mrb[0].mxu0
    %352 = vmatprep.mubr.f32.mxu0 0.0
    %353 = vmatmul.mubr.f32.gmra.mrb[0].mxu0 %v125
    %v354 = vpop.f32.mrb[0].mxu0
    %v355 = vadd.f32 %v151, %v354
    %v356 = vpop.f32.mrb[0].mxu0
    %357 = vmatprep.mubr.f32.mxu0 0.0
    %358 = vmatmul.mubr.f32.gmra.mrb[0].mxu0 %v126
    %v359 = vpop.f32.mrb[0].mxu0
    %v360 = vadd.f32 %v151, %v359
    %v361 = vpop.f32.mrb[0].mxu0
    %362 = vmatprep.mubr.f32.mxu0 0.0
    %363 = vmatmul.mubr.f32.gmra.mrb[0].mxu0 %v127
    %v364 = vpop.f32.mrb[0].mxu0
    %v365 = vadd.f32 %v151, %v364
    %v366 = vpop.f32.mrb[0].mxu0
    %367 = vmatprep.mubr.f32.mxu0 0.0
    %368 = vmatmul.mubr.f32.gmra.mrb[0].mxu0 %v128
    %v369 = vpop.f32.mrb[0].mxu0
    %v370 = vadd.f32 %v151, %v369
    %v371 = vpop.f32.mrb[0].mxu0
    %372 = vmatprep.mubr.f32.mxu0 0.0
    %373 = vmatmul.mubr.f32.gmra.mrb[0].mxu0 %v129
    %v374 = vpop.f32.mrb[0].mxu0
    %v375 = vadd.f32 %v151, %v374
    %v376 = vpop.f32.mrb[0].mxu0
    %377 = vdwg.mxu0
    %v378 = vmax.f32 %v220, 0.0
    %v379 = vmax.f32 %v225, 0.0
    %v380 = vmax.f32 %v230, 0.0
    %v381 = vmax.f32 %v235, 0.0
    %v382 = vmax.f32 %v240, 0.0
    %v383 = vmax.f32 %v245, 0.0
    %v384 = vmax.f32 %v250, 0.0
    %v385 = vmax.f32 %v255, 0.0
    %v386 = vmax.f32 %v260, 0.0
    %v387 = vmax.f32 %v265, 0.0
    %v388 = vmax.f32 %v270, 0.0
    %v389 = vmax.f32 %v275, 0.0
    %v390 = vmax.f32 %v280, 0.0
    %v391 = vmax.f32 %v285, 0.0
    %v392 = vmax.f32 %v290, 0.0
    %v393 = vmax.f32 %v295, 0.0
    %v394 = vmax.f32 %v300, 0.0
    %v395 = vmax.f32 %v305, 0.0
    %v396 = vmax.f32 %v310, 0.0
    %v397 = vmax.f32 %v315, 0.0
    %v398 = vmax.f32 %v320, 0.0
    %v399 = vmax.f32 %v325, 0.0
    %v400 = vmax.f32 %v330, 0.0
    %v401 = vmax.f32 %v335, 0.0
    %v402 = vmax.f32 %v340, 0.0
    %v403 = vmax.f32 %v345, 0.0
    %v404 = vmax.f32 %v350, 0.0
    %v405 = vmax.f32 %v355, 0.0
    %v406 = vmax.f32 %v360, 0.0
    %v407 = vmax.f32 %v365, 0.0
    %v408 = vmax.f32 %v370, 0.0
    %v409 = vmax.f32 %v375, 0.0
    %v410 = vld [vmem:[#allocation2] sm:$0xff]
    %v411 = vld [vmem:[#allocation2 + $0x8] sm:$0xff]
    %v412 = vld [vmem:[#allocation2 + $0x10] sm:$0xff]
    %v413 = vld [vmem:[#allocation2 + $0x18] sm:$0xff]
    %v414 = vld [vmem:[#allocation2 + $0x20] sm:$0xff]
    %v415 = vld [vmem:[#allocation2 + $0x28] sm:$0xff]
    %v416 = vld [vmem:[#allocation2 + $0x30] sm:$0xff]
    %v417 = vld [vmem:[#allocation2 + $0x38] sm:$0xff]
    %v418 = vld [vmem:[#allocation2 + $0x40] sm:$0xff]
    %v419 = vld [vmem:[#allocation2 + $0x48] sm:$0xff]
    %v420 = vld [vmem:[#allocation2 + $0x50] sm:$0xff]
    %v421 = vld [vmem:[#allocation2 + $0x58] sm:$0xff]
    %v422 = vld [vmem:[#allocation2 + $0x60] sm:$0xff]
    %v423 = vld [vmem:[#allocation2 + $0x68] sm:$0xff]
    %v424 = vld [vmem:[#allocation2 + $0x70] sm:$0xff]
    %v425 = vld [vmem:[#allocation2 + $0x78] sm:$0xff]
    %v426 = vld [vmem:[#allocation2 + $0x80] sm:$0xff]
    %v427 = vld [vmem:[#allocation2 + $0x88] sm:$0xff]
    %v428 = vld [vmem:[#allocation2 + $0x90] sm:$0xff]
    %v429 = vld [vmem:[#allocation2 + $0x98] sm:$0xff]
    %v430 = vld [vmem:[#allocation2 + $0xa0] sm:$0xff]
    %v431 = vld [vmem:[#allocation2 + $0xa8] sm:$0xff]
    %v432 = vld [vmem:[#allocation2 + $0xb0] sm:$0xff]
    %v433 = vld [vmem:[#allocation2 + $0xb8] sm:$0xff]
    %v434 = vld [vmem:[#allocation2 + $0xc0] sm:$0xff]
    %v435 = vld [vmem:[#allocation2 + $0xc8] sm:$0xff]
    %v436 = vld [vmem:[#allocation2 + $0xd0] sm:$0xff]
    %v437 = vld [vmem:[#allocation2 + $0xd8] sm:$0xff]
    %v438 = vld [vmem:[#allocation2 + $0xe0] sm:$0xff]
    %v439 = vld [vmem:[#allocation2 + $0xe8] sm:$0xff]
    %v440 = vld [vmem:[#allocation2 + $0xf0] sm:$0xff]
    %v441 = vld [vmem:[#allocation2 + $0xf8] sm:$0xff]
    %v442 = vld [vmem:[#allocation8] sm:$0xff]
    %v443 = vld [vmem:[#allocation8 + $0x8] sm:$0xff]
    %v444 = vld [vmem:[#allocation8 + $0x10] sm:$0xff]
    %v445 = vld [vmem:[#allocation8 + $0x18] sm:$0xff]
    %v446 = vld [vmem:[#allocation8 + $0x20] sm:$0xff]
    %v447 = vld [vmem:[#allocation8 + $0x28] sm:$0xff]
    %v448 = vld [vmem:[#allocation8 + $0x30] sm:$0xff]
    %v449 = vld [vmem:[#allocation8 + $0x38] sm:$0xff]
    %v450 = vld [vmem:[#allocation8 + $0x40] sm:$0xff]
    %v451 = vld [vmem:[#allocation8 + $0x48] sm:$0xff]
    %v452 = vld [vmem:[#allocation8 + $0x50] sm:$0xff]
    %v453 = vld [vmem:[#allocation8 + $0x58] sm:$0xff]
    %v454 = vld [vmem:[#allocation8 + $0x60] sm:$0xff]
    %v455 = vld [vmem:[#allocation8 + $0x68] sm:$0xff]
    %v456 = vld [vmem:[#allocation8 + $0x70] sm:$0xff]
    %v457 = vld [vmem:[#allocation8 + $0x78] sm:$0xff]
    %458 = vmatprep.subr.mxu0 0.0
    %459 = vmatpush1.msra.mxu0 %v442
    %460 = vmatprep.subr.mxu0 0.0
    %461 = vmatpush1.msra.mxu0 %v443
    %462 = vmatprep.subr.mxu0 0.0
    %463 = vmatpush1.msra.mxu0 %v444
    %464 = vmatprep.subr.mxu0 0.0
    %465 = vmatpush1.msra.mxu0 %v445
    %466 = vmatprep.subr.mxu0 0.0
    %467 = vmatpush1.msra.mxu0 %v446
    %468 = vmatprep.subr.mxu0 0.0
    %469 = vmatpush1.msra.mxu0 %v447
    %470 = vmatprep.subr.mxu0 0.0
    %471 = vmatpush1.msra.mxu0 %v448
    %472 = vmatprep.subr.mxu0 0.0
    %473 = vmatpush1.msra.mxu0 %v449
    %474 = vmatprep.subr.mxu0 0.0
    %475 = vmatpush1.msra.mxu0 %v450
    %476 = vmatprep.subr.mxu0 0.0
    %477 = vmatpush1.msra.mxu0 %v451
    %478 = vmatprep.subr.mxu0 0.0
    %479 = vmatpush1.msra.mxu0 %v452
    %480 = vmatprep.subr.mxu0 0.0
    %481 = vmatpush1.msra.mxu0 %v453
    %482 = vmatprep.subr.mxu0 0.0
    %483 = vmatpush1.msra.mxu0 %v454
    %484 = vmatprep.subr.mxu0 0.0
    %485 = vmatpush1.msra.mxu0 %v455
    %486 = vmatprep.subr.mxu0 0.0
    %487 = vmatpush1.msra.mxu0 %v456
    %488 = vmatprep.subr.mxu0 0.0
    %489 = vmatpush1.msra.mxu0 %v457
    %490 = vmatprep.subr.mxu0 0.0
    %491 = vmatpush1.msra.mxu0 0.0
    %492 = vmatprep.subr.mxu0 0.0
    %493 = vmatpush1.msra.mxu0 0.0
    %494 = vmatprep.subr.mxu0 0.0
    %495 = vmatpush1.msra.mxu0 0.0
    %496 = vmatprep.subr.mxu0 0.0
    %497 = vmatpush1.msra.mxu0 0.0
    %498 = vmatprep.subr.mxu0 0.0
    %499 = vmatpush1.msra.mxu0 0.0
    %500 = vmatprep.subr.mxu0 0.0
    %501 = vmatpush1.msra.mxu0 0.0
    %502 = vmatprep.subr.mxu0 0.0
    %503 = vmatpush1.msra.mxu0 0.0
    %504 = vmatprep.subr.mxu0 0.0
    %505 = vmatpush1.msra.mxu0 0.0
    %506 = vmatprep.subr.mxu0 0.0
    %507 = vmatpush1.msra.mxu0 0.0
    %508 = vmatprep.subr.mxu0 0.0
    %509 = vmatpush1.msra.mxu0 0.0
    %510 = vmatprep.subr.mxu0 0.0
    %511 = vmatpush1.msra.mxu0 0.0
    %512 = vmatprep.subr.mxu0 0.0
    %513 = vmatpush1.msra.mxu0 0.0
    %514 = vmatprep.subr.mxu0 0.0
    %515 = vmatpush1.msra.mxu0 0.0
    %516 = vmatprep.subr.mxu0 0.0
    %517 = vmatpush1.msra.mxu0 0.0
    %518 = vmatprep.subr.mxu0 0.0
    %519 = vmatpush1.msra.mxu0 0.0
    %520 = vmatprep.subr.mxu0 0.0
    %521 = vmatpush1.msra.mxu0 0.0
    %522 = vmatprep.mubr.f32.mxu0 0.0
    %523 = vmatmul.mubr.f32.gmra.mrb[0].mxu0 %v378
    %v524 = vpop.f32.mrb[0].mxu0
    %v525 = vadd.f32 0.0, %v524
    %v526 = vpop.f32.mrb[0].mxu0
    %527 = vmatprep.mubr.f32.mxu0 0.0
    %528 = vmatmul.mubr.f32.gmra.mrb[0].mxu0 %v379
    %v529 = vpop.f32.mrb[0].mxu0
    %v530 = vadd.f32 0.0, %v529
    %v531 = vpop.f32.mrb[0].mxu0
    %532 = vmatprep.mubr.f32.mxu0 0.0
    %533 = vmatmul.mubr.f32.gmra.mrb[0].mxu0 %v380
    %v534 = vpop.f32.mrb[0].mxu0
    %v535 = vadd.f32 0.0, %v534
    %v536 = vpop.f32.mrb[0].mxu0
    %537 = vmatprep.mubr.f32.mxu0 0.0
    %538 = vmatmul.mubr.f32.gmra.mrb[0].mxu0 %v381
    %v539 = vpop.f32.mrb[0].mxu0
    %v540 = vadd.f32 0.0, %v539
    %v541 = vpop.f32.mrb[0].mxu0
    %542 = vmatprep.mubr.f32.mxu0 0.0
    %543 = vmatmul.mubr.f32.gmra.mrb[0].mxu0 %v382
    %v544 = vpop.f32.mrb[0].mxu0
    %v545 = vadd.f32 0.0, %v544
    %v546 = vpop.f32.mrb[0].mxu0
    %547 = vmatprep.mubr.f32.mxu0 0.0
    %548 = vmatmul.mubr.f32.gmra.mrb[0].mxu0 %v383
    %v549 = vpop.f32.mrb[0].mxu0
    %v550 = vadd.f32 0.0, %v549
    %v551 = vpop.f32.mrb[0].mxu0
    %552 = vmatprep.mubr.f32.mxu0 0.0
    %553 = vmatmul.mubr.f32.gmra.mrb[0].mxu0 %v384
    %v554 = vpop.f32.mrb[0].mxu0
    %v555 = vadd.f32 0.0, %v554
    %v556 = vpop.f32.mrb[0].mxu0
    %557 = vmatprep.mubr.f32.mxu0 0.0
    %558 = vmatmul.mubr.f32.gmra.mrb[0].mxu0 %v385
    %v559 = vpop.f32.mrb[0].mxu0
    %v560 = vadd.f32 0.0, %v559
    %v561 = vpop.f32.mrb[0].mxu0
    %562 = vmatprep.mubr.f32.mxu0 0.0
    %563 = vmatmul.mubr.f32.gmra.mrb[0].mxu0 %v386
    %v564 = vpop.f32.mrb[0].mxu0
    %v565 = vadd.f32 0.0, %v564
    %v566 = vpop.f32.mrb[0].mxu0
    %567 = vmatprep.mubr.f32.mxu0 0.0
    %568 = vmatmul.mubr.f32.gmra.mrb[0].mxu0 %v387
    %v569 = vpop.f32.mrb[0].mxu0
    %v570 = vadd.f32 0.0, %v569
    %v571 = vpop.f32.mrb[0].mxu0
    %572 = vmatprep.mubr.f32.mxu0 0.0
    %573 = vmatmul.mubr.f32.gmra.mrb[0].mxu0 %v388
    %v574 = vpop.f32.mrb[0].mxu0
    %v575 = vadd.f32 0.0, %v574
    %v576 = vpop.f32.mrb[0].mxu0
    %577 = vmatprep.mubr.f32.mxu0 0.0
    %578 = vmatmul.mubr.f32.gmra.mrb[0].mxu0 %v389
    %v579 = vpop.f32.mrb[0].mxu0
    %v580 = vadd.f32 0.0, %v579
    %v581 = vpop.f32.mrb[0].mxu0
    %582 = vmatprep.mubr.f32.mxu0 0.0
    %583 = vmatmul.mubr.f32.gmra.mrb[0].mxu0 %v390
    %v584 = vpop.f32.mrb[0].mxu0
    %v585 = vadd.f32 0.0, %v584
    %v586 = vpop.f32.mrb[0].mxu0
    %587 = vmatprep.mubr.f32.mxu0 0.0
    %588 = vmatmul.mubr.f32.gmra.mrb[0].mxu0 %v391
    %v589 = vpop.f32.mrb[0].mxu0
    %v590 = vadd.f32 0.0, %v589
    %v591 = vpop.f32.mrb[0].mxu0
    %592 = vmatprep.mubr.f32.mxu0 0.0
    %593 = vmatmul.mubr.f32.gmra.mrb[0].mxu0 %v392
    %v594 = vpop.f32.mrb[0].mxu0
    %v595 = vadd.f32 0.0, %v594
    %v596 = vpop.f32.mrb[0].mxu0
    %597 = vmatprep.mubr.f32.mxu0 0.0
    %598 = vmatmul.mubr.f32.gmra.mrb[0].mxu0 %v393
    %v599 = vpop.f32.mrb[0].mxu0
    %v600 = vadd.f32 0.0, %v599
    %v601 = vpop.f32.mrb[0].mxu0
    %602 = vmatprep.mubr.f32.mxu0 0.0
    %603 = vmatmul.mubr.f32.gmra.mrb[0].mxu0 %v394
    %v604 = vpop.f32.mrb[0].mxu0
    %v605 = vadd.f32 0.0, %v604
    %v606 = vpop.f32.mrb[0].mxu0
    %607 = vmatprep.mubr.f32.mxu0 0.0
    %608 = vmatmul.mubr.f32.gmra.mrb[0].mxu0 %v395
    %v609 = vpop.f32.mrb[0].mxu0
    %v610 = vadd.f32 0.0, %v609
    %v611 = vpop.f32.mrb[0].mxu0
    %612 = vmatprep.mubr.f32.mxu0 0.0
    %613 = vmatmul.mubr.f32.gmra.mrb[0].mxu0 %v396
    %v614 = vpop.f32.mrb[0].mxu0
    %v615 = vadd.f32 0.0, %v614
    %v616 = vpop.f32.mrb[0].mxu0
    %617 = vmatprep.mubr.f32.mxu0 0.0
    %618 = vmatmul.mubr.f32.gmra.mrb[0].mxu0 %v397
    %v619 = vpop.f32.mrb[0].mxu0
    %v620 = vadd.f32 0.0, %v619
    %v621 = vpop.f32.mrb[0].mxu0
    %622 = vmatprep.mubr.f32.mxu0 0.0
    %623 = vmatmul.mubr.f32.gmra.mrb[0].mxu0 %v398
    %v624 = vpop.f32.mrb[0].mxu0
    %v625 = vadd.f32 0.0, %v624
    %v626 = vpop.f32.mrb[0].mxu0
    %627 = vmatprep.mubr.f32.mxu0 0.0
    %628 = vmatmul.mubr.f32.gmra.mrb[0].mxu0 %v399
    %v629 = vpop.f32.mrb[0].mxu0
    %v630 = vadd.f32 0.0, %v629
    %v631 = vpop.f32.mrb[0].mxu0
    %632 = vmatprep.mubr.f32.mxu0 0.0
    %633 = vmatmul.mubr.f32.gmra.mrb[0].mxu0 %v400
    %v634 = vpop.f32.mrb[0].mxu0
    %v635 = vadd.f32 0.0, %v634
    %v636 = vpop.f32.mrb[0].mxu0
    %637 = vmatprep.mubr.f32.mxu0 0.0
    %638 = vmatmul.mubr.f32.gmra.mrb[0].mxu0 %v401
    %v639 = vpop.f32.mrb[0].mxu0
    %v640 = vadd.f32 0.0, %v639
    %v641 = vpop.f32.mrb[0].mxu0
    %642 = vmatprep.mubr.f32.mxu0 0.0
    %643 = vmatmul.mubr.f32.gmra.mrb[0].mxu0 %v402
    %v644 = vpop.f32.mrb[0].mxu0
    %v645 = vadd.f32 0.0, %v644
    %v646 = vpop.f32.mrb[0].mxu0
    %647 = vmatprep.mubr.f32.mxu0 0.0
    %648 = vmatmul.mubr.f32.gmra.mrb[0].mxu0 %v403
    %v649 = vpop.f32.mrb[0].mxu0
    %v650 = vadd.f32 0.0, %v649
    %v651 = vpop.f32.mrb[0].mxu0
    %652 = vmatprep.mubr.f32.mxu0 0.0
    %653 = vmatmul.mubr.f32.gmra.mrb[0].mxu0 %v404
    %v654 = vpop.f32.mrb[0].mxu0
    %v655 = vadd.f32 0.0, %v654
    %v656 = vpop.f32.mrb[0].mxu0
    %657 = vmatprep.mubr.f32.mxu0 0.0
    %658 = vmatmul.mubr.f32.gmra.mrb[0].mxu0 %v405
    %v659 = vpop.f32.mrb[0].mxu0
    %v660 = vadd.f32 0.0, %v659
    %v661 = vpop.f32.mrb[0].mxu0
    %662 = vmatprep.mubr.f32.mxu0 0.0
    %663 = vmatmul.mubr.f32.gmra.mrb[0].mxu0 %v406
    %v664 = vpop.f32.mrb[0].mxu0
    %v665 = vadd.f32 0.0, %v664
    %v666 = vpop.f32.mrb[0].mxu0
    %667 = vmatprep.mubr.f32.mxu0 0.0
    %668 = vmatmul.mubr.f32.gmra.mrb[0].mxu0 %v407
    %v669 = vpop.f32.mrb[0].mxu0
    %v670 = vadd.f32 0.0, %v669
    %v671 = vpop.f32.mrb[0].mxu0
    %672 = vmatprep.mubr.f32.mxu0 0.0
    %673 = vmatmul.mubr.f32.gmra.mrb[0].mxu0 %v408
    %v674 = vpop.f32.mrb[0].mxu0
    %v675 = vadd.f32 0.0, %v674
    %v676 = vpop.f32.mrb[0].mxu0
    %677 = vmatprep.mubr.f32.mxu0 0.0
    %678 = vmatmul.mubr.f32.gmra.mrb[0].mxu0 %v409
    %v679 = vpop.f32.mrb[0].mxu0
    %v680 = vadd.f32 0.0, %v679
    %v681 = vpop.f32.mrb[0].mxu0
    %682 = vdwg.mxu0
    %v683 = vadd.f32 %v410, %v525
    %v684 = vadd.f32 %v411, %v530
    %v685 = vadd.f32 %v412, %v535
    %v686 = vadd.f32 %v413, %v540
    %v687 = vadd.f32 %v414, %v545
    %v688 = vadd.f32 %v415, %v550
    %v689 = vadd.f32 %v416, %v555
    %v690 = vadd.f32 %v417, %v560
    %v691 = vadd.f32 %v418, %v565
    %v692 = vadd.f32 %v419, %v570
    %v693 = vadd.f32 %v420, %v575
    %v694 = vadd.f32 %v421, %v580
    %v695 = vadd.f32 %v422, %v585
    %v696 = vadd.f32 %v423, %v590
    %v697 = vadd.f32 %v424, %v595
    %v698 = vadd.f32 %v425, %v600
    %v699 = vadd.f32 %v426, %v605
    %v700 = vadd.f32 %v427, %v610
    %v701 = vadd.f32 %v428, %v615
    %v702 = vadd.f32 %v429, %v620
    %v703 = vadd.f32 %v430, %v625
    %v704 = vadd.f32 %v431, %v630
    %v705 = vadd.f32 %v432, %v635
    %v706 = vadd.f32 %v433, %v640
    %v707 = vadd.f32 %v434, %v645
    %v708 = vadd.f32 %v435, %v650
    %v709 = vadd.f32 %v436, %v655
    %v710 = vadd.f32 %v437, %v660
    %v711 = vadd.f32 %v438, %v665
    %v712 = vadd.f32 %v439, %v670
    %v713 = vadd.f32 %v440, %v675
    %v714 = vadd.f32 %v441, %v680
    %715 = vst [vmem:[#allocation2] sm:$0xff] %v683
    %716 = vst [vmem:[#allocation2 + $0x8] sm:$0xff] %v684
    %717 = vst [vmem:[#allocation2 + $0x10] sm:$0xff] %v685
    %718 = vst [vmem:[#allocation2 + $0x18] sm:$0xff] %v686
    %719 = vst [vmem:[#allocation2 + $0x20] sm:$0xff] %v687
    %720 = vst [vmem:[#allocation2 + $0x28] sm:$0xff] %v688
    %721 = vst [vmem:[#allocation2 + $0x30] sm:$0xff] %v689
    %722 = vst [vmem:[#allocation2 + $0x38] sm:$0xff] %v690
    %723 = vst [vmem:[#allocation2 + $0x40] sm:$0xff] %v691
    %724 = vst [vmem:[#allocation2 + $0x48] sm:$0xff] %v692
    %725 = vst [vmem:[#allocation2 + $0x50] sm:$0xff] %v693
    %726 = vst [vmem:[#allocation2 + $0x58] sm:$0xff] %v694
    %727 = vst [vmem:[#allocation2 + $0x60] sm:$0xff] %v695
    %728 = vst [vmem:[#allocation2 + $0x68] sm:$0xff] %v696
    %729 = vst [vmem:[#allocation2 + $0x70] sm:$0xff] %v697
    %730 = vst [vmem:[#allocation2 + $0x78] sm:$0xff] %v698
    %731 = vst [vmem:[#allocation2 + $0x80] sm:$0xff] %v699
    %732 = vst [vmem:[#allocation2 + $0x88] sm:$0xff] %v700
    %733 = vst [vmem:[#allocation2 + $0x90] sm:$0xff] %v701
    %734 = vst [vmem:[#allocation2 + $0x98] sm:$0xff] %v702
    %735 = vst [vmem:[#allocation2 + $0xa0] sm:$0xff] %v703
    %736 = vst [vmem:[#allocation2 + $0xa8] sm:$0xff] %v704
    %737 = vst [vmem:[#allocation2 + $0xb0] sm:$0xff] %v705
    %738 = vst [vmem:[#allocation2 + $0xb8] sm:$0xff] %v706
    %739 = vst [vmem:[#allocation2 + $0xc0] sm:$0xff] %v707
    %740 = vst [vmem:[#allocation2 + $0xc8] sm:$0xff] %v708
    %741 = vst [vmem:[#allocation2 + $0xd0] sm:$0xff] %v709
    %742 = vst [vmem:[#allocation2 + $0xd8] sm:$0xff] %v710
    %743 = vst [vmem:[#allocation2 + $0xe0] sm:$0xff] %v711
    %744 = vst [vmem:[#allocation2 + $0xe8] sm:$0xff] %v712
    %745 = vst [vmem:[#allocation2 + $0xf0] sm:$0xff] %v713
    %746 = vst [vmem:[#allocation2 + $0xf8] sm:$0xff] %v714
    // Predicated region
    $region38: #{tpu_custom_call.1} parent=1 // pred_check
      %p747 = pneg %p62
    $region39: #{tpu_custom_call.1} parent=1 // pred_check_branch
      %749 = sbr.rel (%p747) target = $region41
    $region40: #{tpu_custom_call.1} parent=1 // pred_region
      %v750 = vld [vmem:[#allocation2] sm:$0xff]
      %v751 = vld [vmem:[#allocation2 + $0x8] sm:$0xff]
      %v752 = vld [vmem:[#allocation2 + $0x10] sm:$0xff]
      %v753 = vld [vmem:[#allocation2 + $0x18] sm:$0xff]
      %v754 = vld [vmem:[#allocation2 + $0x20] sm:$0xff]
      %v755 = vld [vmem:[#allocation2 + $0x28] sm:$0xff]
      %v756 = vld [vmem:[#allocation2 + $0x30] sm:$0xff]
      %v757 = vld [vmem:[#allocation2 + $0x38] sm:$0xff]
      %v758 = vld [vmem:[#allocation2 + $0x40] sm:$0xff]
      %v759 = vld [vmem:[#allocation2 + $0x48] sm:$0xff]
      %v760 = vld [vmem:[#allocation2 + $0x50] sm:$0xff]
      %v761 = vld [vmem:[#allocation2 + $0x58] sm:$0xff]
      %v762 = vld [vmem:[#allocation2 + $0x60] sm:$0xff]
      %v763 = vld [vmem:[#allocation2 + $0x68] sm:$0xff]
      %v764 = vld [vmem:[#allocation2 + $0x70] sm:$0xff]
      %v765 = vld [vmem:[#allocation2 + $0x78] sm:$0xff]
      %v766 = vld [vmem:[#allocation2 + $0x80] sm:$0xff]
      %v767 = vld [vmem:[#allocation2 + $0x88] sm:$0xff]
      %v768 = vld [vmem:[#allocation2 + $0x90] sm:$0xff]
      %v769 = vld [vmem:[#allocation2 + $0x98] sm:$0xff]
      %v770 = vld [vmem:[#allocation2 + $0xa0] sm:$0xff]
      %v771 = vld [vmem:[#allocation2 + $0xa8] sm:$0xff]
      %v772 = vld [vmem:[#allocation2 + $0xb0] sm:$0xff]
      %v773 = vld [vmem:[#allocation2 + $0xb8] sm:$0xff]
      %v774 = vld [vmem:[#allocation2 + $0xc0] sm:$0xff]
      %v775 = vld [vmem:[#allocation2 + $0xc8] sm:$0xff]
      %v776 = vld [vmem:[#allocation2 + $0xd0] sm:$0xff]
      %v777 = vld [vmem:[#allocation2 + $0xd8] sm:$0xff]
      %v778 = vld [vmem:[#allocation2 + $0xe0] sm:$0xff]
      %v779 = vld [vmem:[#allocation2 + $0xe8] sm:$0xff]
      %v780 = vld [vmem:[#allocation2 + $0xf0] sm:$0xff]
      %v781 = vld [vmem:[#allocation2 + $0xf8] sm:$0xff]
      %v782 = vld [vmem:[%s4] sm:$0x1]
      %v784 = vlaneseq
      %v785 = vshrl.u32 %v784, 7
      %v786 = vsub.s32 0, %v785
      %v787 = vrot.slane %v782, %v786
      %v789 = vadd.f32 %v750, %v787
      %v790 = vadd.f32 %v751, %v787
      %v791 = vadd.f32 %v752, %v787
      %v792 = vadd.f32 %v753, %v787
      %v793 = vadd.f32 %v754, %v787
      %v794 = vadd.f32 %v755, %v787
      %v795 = vadd.f32 %v756, %v787
      %v796 = vadd.f32 %v757, %v787
      %v797 = vadd.f32 %v758, %v787
      %v798 = vadd.f32 %v759, %v787
      %v799 = vadd.f32 %v760, %v787
      %v800 = vadd.f32 %v761, %v787
      %v801 = vadd.f32 %v762, %v787
      %v802 = vadd.f32 %v763, %v787
      %v803 = vadd.f32 %v764, %v787
      %v804 = vadd.f32 %v765, %v787
      %v805 = vadd.f32 %v766, %v787
      %v806 = vadd.f32 %v767, %v787
      %v807 = vadd.f32 %v768, %v787
      %v808 = vadd.f32 %v769, %v787
      %v809 = vadd.f32 %v770, %v787
      %v810 = vadd.f32 %v771, %v787
      %v811 = vadd.f32 %v772, %v787
      %v812 = vadd.f32 %v773, %v787
      %v813 = vadd.f32 %v774, %v787
      %v814 = vadd.f32 %v775, %v787
      %v815 = vadd.f32 %v776, %v787
      %v816 = vadd.f32 %v777, %v787
      %v817 = vadd.f32 %v778, %v787
      %v818 = vadd.f32 %v779, %v787
      %v819 = vadd.f32 %v780, %v787
      %v820 = vadd.f32 %v781, %v787
      %821 = vst [vmem:[#allocation9] sm:$0xff] %v789
      %822 = vst [vmem:[#allocation9 + $0x8] sm:$0xff] %v790
      %823 = vst [vmem:[#allocation9 + $0x10] sm:$0xff] %v791
      %824 = vst [vmem:[#allocation9 + $0x18] sm:$0xff] %v792
      %825 = vst [vmem:[#allocation9 + $0x20] sm:$0xff] %v793
      %826 = vst [vmem:[#allocation9 + $0x28] sm:$0xff] %v794
      %827 = vst [vmem:[#allocation9 + $0x30] sm:$0xff] %v795
      %828 = vst [vmem:[#allocation9 + $0x38] sm:$0xff] %v796
      %829 = vst [vmem:[#allocation9 + $0x40] sm:$0xff] %v797
      %830 = vst [vmem:[#allocation9 + $0x48] sm:$0xff] %v798
      %831 = vst [vmem:[#allocation9 + $0x50] sm:$0xff] %v799
      %832 = vst [vmem:[#allocation9 + $0x58] sm:$0xff] %v800
      %833 = vst [vmem:[#allocation9 + $0x60] sm:$0xff] %v801
      %834 = vst [vmem:[#allocation9 + $0x68] sm:$0xff] %v802
      %835 = vst [vmem:[#allocation9 + $0x70] sm:$0xff] %v803
      %836 = vst [vmem:[#allocation9 + $0x78] sm:$0xff] %v804
      %837 = vst [vmem:[#allocation9 + $0x80] sm:$0xff] %v805
      %838 = vst [vmem:[#allocation9 + $0x88] sm:$0xff] %v806
      %839 = vst [vmem:[#allocation9 + $0x90] sm:$0xff] %v807
      %840 = vst [vmem:[#allocation9 + $0x98] sm:$0xff] %v808
      %841 = vst [vmem:[#allocation9 + $0xa0] sm:$0xff] %v809
      %842 = vst [vmem:[#allocation9 + $0xa8] sm:$0xff] %v810
      %843 = vst [vmem:[#allocation9 + $0xb0] sm:$0xff] %v811
      %844 = vst [vmem:[#allocation9 + $0xb8] sm:$0xff] %v812
      %845 = vst [vmem:[#allocation9 + $0xc0] sm:$0xff] %v813
      %846 = vst [vmem:[#allocation9 + $0xc8] sm:$0xff] %v814
      %847 = vst [vmem:[#allocation9 + $0xd0] sm:$0xff] %v815
      %848 = vst [vmem:[#allocation9 + $0xd8] sm:$0xff] %v816
      %849 = vst [vmem:[#allocation9 + $0xe0] sm:$0xff] %v817
      %850 = vst [vmem:[#allocation9 + $0xe8] sm:$0xff] %v818
      %851 = vst [vmem:[#allocation9 + $0xf0] sm:$0xff] %v819
      %852 = vst [vmem:[#allocation9 + $0xf8] sm:$0xff] %v820
    $region41: #{tpu_custom_call.1} parent=1 // pred_fallthru
      _
    // Predicated region
    $region42: #{tpu_custom_call.1} parent=1 // pred_check
      _
    $region43: #{tpu_custom_call.1} parent=1 // pred_check_branch
      %854 = sbr.rel (0) target = $region45
    $region44: #{tpu_custom_call.1} parent=1 // pred_region
      %s856 = ssub.s32 4096, 4096
      %857 = vsyncadd [#allocation5], %s856
      %s858 = sshll.u32 [#allocation9], 4
      %s859 = int_to_ptr.vmem [resolvable:$true] %s858
      %864 = dma.vmem_to_hbm [thread:$0]  %s859, 4096, %s5, [#allocation5], 128, 128, 8
    $region45: #{tpu_custom_call.1} parent=1 // pred_fallthru
      _
    // Predicated region
    $region46: #{tpu_custom_call.1} parent=1 // pred_check
      _
    $region47: #{tpu_custom_call.1} parent=1 // pred_check_branch
      %866 = sbr.rel (0) target = $region49
    $region48: #{tpu_custom_call.1} parent=1 // pred_region
      %867 = dma.done [#allocation5], 4096
    $region49: #{tpu_custom_call.1} parent=1 // pred_fallthru
      _
    %868 = vsyncpa [#allocation4], 1
    %869 = vsyncpa [#allocation7], 1
    %870 = vsyncpa [#allocation5], 1

</llo_original>
